<compile_context>
chip_gen: v5e
topology: v5e:2x2
jax: 0.10.0
libtpu: 0.0.40
codegen_flags: <defaults>
</compile_context>

<pallas_src>
import functools

import jax
import jax.numpy as jnp
from jax import lax
from jax.experimental import pallas as pl
from jax.experimental.pallas import tpu as pltpu


def _round_up(x, m):
    return ((x + m - 1) // m) * m


def _cdiv(a, b):
    return -(-a // b)


def _default_compute_dtype():
    """bf16 matmul/tanh on v6e/v7x (bf16 VPU+EUP+MXU); f32 elsewhere (v5e and
    older have no bf16 VPU/EUP, so casting would only add convert ops)."""
    try:
        kind = jax.devices()[0].device_kind.lower()
    except Exception:
        return "float32"
    if "v6" in kind or "v7" in kind:
        return "bfloat16"
    return "float32"


def _mlp_kernel(in_dims, in_transposed, n_layers, sub, reduce_last, compute_dtype,
                *refs):
    """refs = (inp_0..inp_{n-1}, w0', b0', w1, b1, ..., out_ref).

    Activations are (features, tb). Layer-0 weight is f32 with normalization
    folded in; hidden weights are `compute_dtype`; the last weight is transposed
    to (in_last, out_dim) f32 when `reduce_last`. Biases are (out_i, 1) f32.
    """
    n_in = len(in_dims)
    inp_refs = refs[:n_in]
    param_refs = refs[n_in:n_in + 2 * n_layers]
    out_ref = refs[n_in + 2 * n_layers]

    tb = out_ref.shape[-1]
    n_sub = tb // sub

    # Parameters are tiny (<= a few KiB each): load once per grid step, reuse
    # across all sub-chunks (they live in vregs / stay loop-invariant).
    ws = [param_refs[2 * i][...] for i in range(n_layers)]
    bs = [param_refs[2 * i + 1][...] for i in range(n_layers)]

    def chunk(start):
        # ---- layer 0: "concatenate" inputs by accumulating per-input pieces ----
        h = None
        off = 0
        for j, d in enumerate(in_dims):
            if in_transposed[j]:
                xj = inp_refs[j][:, pl.ds(start, sub)]               # (d, sub) f32
                if d == 1:
                    # outer-product broadcast FMA on the VPU
                    c = ws[0][:, off:off + 1].astype(jnp.float32) * xj
                else:
                    c = jnp.dot(ws[0][:, off:off + d].astype(compute_dtype),
                                xj.astype(compute_dtype),
                                preferred_element_type=jnp.float32)
            else:
                xj = inp_refs[j][pl.ds(start, sub), :]               # (sub, d) f32
                c = lax.dot_general(
                    ws[0][:, off:off + d].astype(compute_dtype),
                    xj.astype(compute_dtype),
                    (((1,), (1,)), ((), ())),
                    preferred_element_type=jnp.float32)              # (h0, sub)
            h = c if h is None else h + c
            off += d
        h = h + bs[0]
        if n_layers > 1:
            h = jnp.tanh(h.astype(compute_dtype))

        # ---- hidden layers: tanh(W_i @ h + b_i), f32 accumulate ----
        for i in range(1, n_layers - 1):
            h = jnp.dot(ws[i], h.astype(ws[i].dtype),
                        preferred_element_type=jnp.float32) + bs[i]
            h = jnp.tanh(h.astype(compute_dtype))

        # ---- last layer: no activation ----
        if n_layers > 1:
            if reduce_last:
                # (in,1) * (in,sub) -> sublane reduce -> (1,sub): VPU + XLU,
                # avoids a 1-row MXU matmul.
                h = jnp.sum(ws[-1] * h.astype(jnp.float32),
                            axis=0, keepdims=True) + bs[-1]
            else:
                h = jnp.dot(ws[-1], h.astype(ws[-1].dtype),
                            preferred_element_type=jnp.float32) + bs[-1]
        return h

    if n_sub == 1:
        out_ref[...] = chunk(0).astype(out_ref.dtype)
    else:
        def body(s, carry):
            start = pl.multiple_of(s * sub, 128)
            out_ref[:, pl.ds(start, sub)] = chunk(start).astype(out_ref.dtype)
            return carry
        lax.fori_loop(0, n_sub, body, 0)


@functools.partial(jax.jit, static_argnames=("block_batch", "compute_dtype"))
def _forward_impl(inputs_tuple, lb, ub, weights, biases, *, block_batch,
                  compute_dtype):
    cdt = jnp.dtype(compute_dtype)
    in_dims = tuple(int(a.shape[1]) for a in inputs_tuple)
    batch = int(inputs_tuple[0].shape[0])
    n_layers = len(weights)
    out_dim = int(weights[-1].shape[0])

    # --- Fold normalization into layer 0 (tiny, fuses under jit). ---
    lb_f = jnp.asarray(lb, jnp.float32).reshape(-1)
    ub_f = jnp.asarray(ub, jnp.float32).reshape(-1)
    scale = 2.0 / (ub_f - lb_f)                    # (in_dim,)
    shift = -2.0 * lb_f / (ub_f - lb_f) - 1.0      # (in_dim,)
    w0 = jnp.asarray(weights[0], jnp.float32)
    b0 = jnp.asarray(biases[0], jnp.float32).reshape(-1)
    w0_f = w0 * scale[None, :]                     # keep f32 (layer 0 is VPU work)
    b0_f = b0 + w0 @ shift

    reduce_last = (n_layers > 1) and (out_dim == 1)

    ws = [w0_f]
    for i in range(1, n_layers):
        wi = jnp.asarray(weights[i], jnp.float32)
        if i == n_layers - 1:
            ws.append(wi.T if reduce_last else wi.astype(cdt))  # (in_last, 1) f32
        else:
            ws.append(wi.astype(cdt))
    bs = [b0_f.reshape(-1, 1)] + [jnp.asarray(b, jnp.float32).reshape(-1, 1)
                                  for b in biases[1:]]

    # --- Batch tiling: batch on the lane axis, big tile, but >= 2 grid steps ---
    tb = _round_up(min(int(block_batch), batch), 128)
    if _cdiv(batch, tb) < 2 and batch > 128:
        tb = _round_up(_cdiv(batch, 2), 128)       # keep both v7x TCs busy
    grid = (_cdiv(batch, tb),)

    # In-kernel sub-chunk size (keep activations in vregs end-to-end).
    sub = min(512, tb)
    while tb % sub != 0:
        sub -= 128

    operands = []
    in_specs = []
    in_transposed = []
    for a, d in zip(inputs_tuple, in_dims):
        a = jnp.asarray(a, jnp.float32)
        if d == 1:
            operands.append(a.T)                   # (B,1)->(1,B): free reshape
            in_specs.append(pl.BlockSpec((1, tb), lambda i: (0, i)))
            in_transposed.append(True)
        else:
            operands.append(a)                     # (B,d): no HBM transpose
            in_specs.append(pl.BlockSpec((tb, d), lambda i: (i, 0)))
            in_transposed.append(False)

    for w, b in zip(ws, bs):
        operands.append(w)
        in_specs.append(pl.BlockSpec(w.shape, lambda i: (0, 0)))   # VMEM-resident
        operands.append(b)
        in_specs.append(pl.BlockSpec(b.shape, lambda i: (0, 0)))   # VMEM-resident

    out_shape = jax.ShapeDtypeStruct((out_dim, batch), jnp.float32)
    out_spec = pl.BlockSpec((out_dim, tb), lambda i: (0, i))       # lane-dense store

    kernel = functools.partial(_mlp_kernel, in_dims, tuple(in_transposed),
                               n_layers, sub, reduce_last, cdt)

    out_t = pl.pallas_call(
        kernel,
        grid=grid,
        out_shape=out_shape,
        in_specs=in_specs,
        out_specs=out_spec,
        compiler_params=pltpu.CompilerParams(
            dimension_semantics=("parallel",)),     # dual-TC sharding on v7x
    )(*operands)

    return out_t.T                                  # (batch, out_dim)


def net_sequential_forward(inputs_tuple, lb, ub, weights, biases, *,
                           block_batch=2048, compute_dtype=None):
    """Pallas implementation of Net_Sequential.forward.

    inputs_tuple : tuple of (batch, d_j) arrays (e.g. (x, t) or (x, t, z))
    lb, ub       : (1, in_dim) or (in_dim,) normalization bounds (ub > lb)
    weights      : list of (out_i, in_i) arrays (torch nn.Linear layout)
    biases       : list of (out_i,) arrays
    block_batch  : batch-tile size (rounded to a multiple of 128 lanes)
    compute_dtype: None (auto: bf16 on v6e/v7x, f32 otherwise), or explicit dtype
    Returns (batch, out_dim) float32.
    """
    inputs_tuple = tuple(inputs_tuple)
    weights = tuple(weights)
    biases = tuple(biases)

    in_dims = tuple(int(a.shape[1]) for a in inputs_tuple)
    batches = {int(a.shape[0]) for a in inputs_tuple}
    if len(batches) != 1:
        raise ValueError("all inputs must share the same batch size")
    if len(weights) != len(biases) or len(weights) < 1:
        raise ValueError("weights/biases lists must be non-empty and equal length")
    if int(weights[0].shape[1]) != sum(in_dims):
        raise ValueError(
            f"weights[0] expects {int(weights[0].shape[1])} input features but the "
            f"concatenated inputs provide {sum(in_dims)}")

    # ub must be strictly > lb: the normalization fold divides by (ub - lb).
    try:
        lbv = jnp.asarray(lb, jnp.float32).reshape(-1)
        ubv = jnp.asarray(ub, jnp.float32).reshape(-1)
        bad = bool(jnp.any(ubv <= lbv))
    except Exception:   # traced (inside jit/grad): skip the eager check
        bad = False
    if bad:
        raise ValueError("Net_Sequential: every column must satisfy ub > lb")

    if compute_dtype is None:
        compute_dtype = _default_compute_dtype()
    compute_dtype = jnp.dtype(compute_dtype).name

    return _forward_impl(inputs_tuple, lb, ub, weights, biases,
                         block_batch=int(block_batch),
                         compute_dtype=compute_dtype)


def init_params(key, nodes):
    """Deterministic init mimicking nn.Linear default (uniform +-1/sqrt(fan_in)).

    Weights are kept in torch layout (out, in); biases are (out,).
    """
    weights, biases = [], []
    for i in range(len(nodes) - 1):
        fan_in, fan_out = int(nodes[i]), int(nodes[i + 1])
        key, kw, kb = jax.random.split(key, 3)
        bound = 1.0 / jnp.sqrt(fan_in)
        w = jax.random.uniform(kw, (fan_out, fan_in), jnp.float32, -bound, bound)
        b = jax.random.uniform(kb, (fan_out,), jnp.float32, -bound, bound)
        weights.append(w)
        biases.append(b)
    return weights, biases


def reference_forward(inputs_tuple, lb, ub, weights, biases):
    """Plain-JAX f32 reference for correctness checking (torch-layout weights)."""
    h = jnp.concatenate([jnp.asarray(a, jnp.float32) for a in inputs_tuple], axis=1)
    lb_f = jnp.asarray(lb, jnp.float32).reshape(1, -1)
    ub_f = jnp.asarray(ub, jnp.float32).reshape(1, -1)
    h = 2.0 * (h - lb_f) / (ub_f - lb_f) - 1.0
    for i in range(len(weights) - 1):
        h = jnp.tanh(h @ weights[i].T + biases[i])
    return h @ weights[-1].T + biases[-1]


if __name__ == "__main__":
    key = jax.random.PRNGKey(0)

    # PINN-style setup: inputs (x, t), nodes = [2, 32, 32, 1].
    # batch=2048 -> tb=1024 (2 grid steps so both v7x cores get work),
    # inner sub-chunk loop over 2 x 512-lane chunks per block.
    nodes = [2, 32, 32, 1]
    batch = 2048

    key, kx, kt = jax.random.split(key, 3)
    x = jax.random.uniform(kx, (batch, 1), jnp.float32, -1.0, 1.0)
    t = jax.random.uniform(kt, (batch, 1), jnp.float32, 0.0, 1.0)

    lb = jnp.array([[-1.0, 0.0]], dtype=jnp.float32)   # (1, in_dim)
    ub = jnp.array([[1.0, 1.0]], dtype=jnp.float32)    # (1, in_dim)

    weights, biases = init_params(key, nodes)

    out = net_sequential_forward((x, t), lb, ub, weights, biases)
    out = jax.block_until_ready(out)

    ref = reference_forward((x, t), lb, ub, weights, biases)

    if _default_compute_dtype() == "bfloat16":
        atol, rtol = 5e-2, 5e-2      # bf16 tanh/matmul path (v6e/v7x)
    else:
        atol, rtol = 1e-5, 1e-4      # full-f32 path (v5e and older)

    assert out.shape == (batch, nodes[-1])
    assert jnp.allclose(out, ref, atol=atol, rtol=rtol), "mismatch vs reference"

    print("KERNEL_OK")
</pallas_src>

<mosaic_0001>
module attributes {stable_mosaic.version = 11 : i64} {
  func.func @_mlp_kernel(%arg0: i32, %arg1: memref<1x1024xf32, #tpu.memory_space<vmem>>, %arg2: memref<1x1024xf32, #tpu.memory_space<vmem>>, %arg3: memref<32x2xf32, #tpu.memory_space<vmem>>, %arg4: memref<32x1xf32, #tpu.memory_space<vmem>>, %arg5: memref<32x32xf32, #tpu.memory_space<vmem>>, %arg6: memref<32x1xf32, #tpu.memory_space<vmem>>, %arg7: memref<32x1xf32, #tpu.memory_space<vmem>>, %arg8: memref<1x1xf32, #tpu.memory_space<vmem>>, %arg9: memref<1x1024xf32, #tpu.memory_space<vmem>>) attributes {dimension_semantics = [#tpu.dimension_semantics<parallel>], iteration_bounds = array<i64: 2>, scalar_prefetch = 0 : i64, scratch_operands = 0 : i64, tpu.core_type = #tpu.core_type<tc>, window_params = [{transform_indices = @transform_0, window_bounds = array<i64: 1, 1024>}, {transform_indices = @transform_1, window_bounds = array<i64: 1, 1024>}, {pipeline_mode = #tpu.pipeline_mode<synchronous>, transform_indices = @transform_2, window_bounds = array<i64: 32, 2>}, {pipeline_mode = #tpu.pipeline_mode<synchronous>, transform_indices = @transform_3, window_bounds = array<i64: 32, 1>}, {pipeline_mode = #tpu.pipeline_mode<synchronous>, transform_indices = @transform_4, window_bounds = array<i64: 32, 32>}, {pipeline_mode = #tpu.pipeline_mode<synchronous>, transform_indices = @transform_5, window_bounds = array<i64: 32, 1>}, {pipeline_mode = #tpu.pipeline_mode<synchronous>, transform_indices = @transform_6, window_bounds = array<i64: 32, 1>}, {pipeline_mode = #tpu.pipeline_mode<synchronous>, transform_indices = @transform_7, window_bounds = array<i64: 1, 1>}, {transform_indices = @transform_8, window_bounds = array<i64: 1, 1024>}]} {
    %c0 = arith.constant 0 : index
    %c0_0 = arith.constant 0 : index
    %0 = vector.load %arg3[%c0, %c0_0] : memref<32x2xf32, #tpu.memory_space<vmem>>, vector<32x2xf32>
    %c0_1 = arith.constant 0 : index
    %c0_2 = arith.constant 0 : index
    %1 = vector.load %arg5[%c0_1, %c0_2] : memref<32x32xf32, #tpu.memory_space<vmem>>, vector<32x32xf32>
    %c0_3 = arith.constant 0 : index
    %c0_4 = arith.constant 0 : index
    %2 = vector.load %arg7[%c0_3, %c0_4] : memref<32x1xf32, #tpu.memory_space<vmem>>, vector<32x1xf32>
    %c0_5 = arith.constant 0 : index
    %c0_6 = arith.constant 0 : index
    %3 = vector.load %arg4[%c0_5, %c0_6] : memref<32x1xf32, #tpu.memory_space<vmem>>, vector<32x1xf32>
    %c0_7 = arith.constant 0 : index
    %c0_8 = arith.constant 0 : index
    %4 = vector.load %arg6[%c0_7, %c0_8] : memref<32x1xf32, #tpu.memory_space<vmem>>, vector<32x1xf32>
    %c0_9 = arith.constant 0 : index
    %c0_10 = arith.constant 0 : index
    %5 = vector.load %arg8[%c0_9, %c0_10] : memref<1x1xf32, #tpu.memory_space<vmem>>, vector<1x1xf32>
    %c0_i32 = arith.constant 0 : i32
    %c2_i32 = arith.constant 2 : i32
    %6 = arith.addi %c0_i32, %c2_i32 : i32
    %c1_i32 = arith.constant 1 : i32
    scf.for %arg10 = %c0_i32 to %6 step %c1_i32  : i32 {
      %c512_i32 = arith.constant 512 : i32
      %7 = arith.muli %arg10, %c512_i32 : i32
      %8 = tpu.assume_multiple %7, 128 : i32
      %c0_12 = arith.constant 0 : index
      %9 = arith.index_cast %8 : i32 to index
      %10 = vector.load %arg1[%c0_12, %9] : memref<1x1024xf32, #tpu.memory_space<vmem>>, vector<1x512xf32>
      %11 = vector.extract_strided_slice %0 {offsets = [0, 0], sizes = [32, 1], strides = [1, 1]} : vector<32x2xf32> to vector<32x1xf32>
      %12 = vector.broadcast %11 : vector<32x1xf32> to vector<32x512xf32>
      %13 = vector.broadcast %10 : vector<1x512xf32> to vector<32x512xf32>
      %14 = arith.mulf %12, %13 : vector<32x512xf32>
      %c0_13 = arith.constant 0 : index
      %15 = arith.index_cast %8 : i32 to index
      %16 = vector.load %arg2[%c0_13, %15] : memref<1x1024xf32, #tpu.memory_space<vmem>>, vector<1x512xf32>
      %17 = vector.extract_strided_slice %0 {offsets = [0, 1], sizes = [32, 1], strides = [1, 1]} : vector<32x2xf32> to vector<32x1xf32>
      %18 = vector.broadcast %17 : vector<32x1xf32> to vector<32x512xf32>
      %19 = vector.broadcast %16 : vector<1x512xf32> to vector<32x512xf32>
      %20 = arith.mulf %18, %19 : vector<32x512xf32>
      %21 = arith.addf %14, %20 : vector<32x512xf32>
      %22 = vector.broadcast %3 : vector<32x1xf32> to vector<32x512xf32>
      %23 = arith.addf %21, %22 : vector<32x512xf32>
      %24 = math.tanh %23 : vector<32x512xf32>
      %cst = arith.constant dense<0.000000e+00> : vector<32x512xf32>
      %25 = tpu.matmul %1, %24, %cst {dimension_numbers = #tpu.dot_dimension_numbers<[1], [0], [0], [1], [0, 0, 1, 1], [], []>} : vector<32x32xf32>, vector<32x512xf32>, vector<32x512xf32> -> vector<32x512xf32>
      %26 = vector.broadcast %4 : vector<32x1xf32> to vector<32x512xf32>
      %27 = arith.addf %25, %26 : vector<32x512xf32>
      %28 = math.tanh %27 : vector<32x512xf32>
      %29 = vector.broadcast %2 : vector<32x1xf32> to vector<32x512xf32>
      %30 = arith.mulf %29, %28 : vector<32x512xf32>
      %cst_14 = arith.constant dense<0.000000e+00> : vector<512xf32>
      %31 = vector.multi_reduction <add>, %30, %cst_14 [0] : vector<32x512xf32> to vector<512xf32>
      %32 = vector.shape_cast %31 : vector<512xf32> to vector<1x512xf32>
      %33 = vector.broadcast %5 : vector<1x1xf32> to vector<1x512xf32>
      %34 = arith.addf %32, %33 : vector<1x512xf32>
      %c0_15 = arith.constant 0 : index
      %35 = arith.index_cast %8 : i32 to index
      %36 = vector.load %arg9[%c0_15, %35] : memref<1x1024xf32, #tpu.memory_space<vmem>>, vector<1x512xf32>
      tpu.vector_store %arg9[%c0_15, %35], %34 {strides = array<i32>} : memref<1x1024xf32, #tpu.memory_space<vmem>>, vector<1x512xf32>,
    }
    %c2_i32_11 = arith.constant 2 : i32
    return
  }
  func.func @transform_0(%arg0: i32) -> (i32, i32) {
    %c0_i32 = arith.constant 0 : i32
    %c0_i32_0 = arith.constant 0 : i32
    return %c0_i32, %arg0 : i32, i32
  }
  func.func @transform_1(%arg0: i32) -> (i32, i32) {
    %c0_i32 = arith.constant 0 : i32
    %c0_i32_0 = arith.constant 0 : i32
    return %c0_i32, %arg0 : i32, i32
  }
  func.func @transform_2(%arg0: i32) -> (i32, i32) {
    %c0_i32 = arith.constant 0 : i32
    %c0_i32_0 = arith.constant 0 : i32
    %c0_i32_1 = arith.constant 0 : i32
    return %c0_i32, %c0_i32_0 : i32, i32
  }
  func.func @transform_3(%arg0: i32) -> (i32, i32) {
    %c0_i32 = arith.constant 0 : i32
    %c0_i32_0 = arith.constant 0 : i32
    %c0_i32_1 = arith.constant 0 : i32
    return %c0_i32, %c0_i32_0 : i32, i32
  }
  func.func @transform_4(%arg0: i32) -> (i32, i32) {
    %c0_i32 = arith.constant 0 : i32
    %c0_i32_0 = arith.constant 0 : i32
    %c0_i32_1 = arith.constant 0 : i32
    return %c0_i32, %c0_i32_0 : i32, i32
  }
  func.func @transform_5(%arg0: i32) -> (i32, i32) {
    %c0_i32 = arith.constant 0 : i32
    %c0_i32_0 = arith.constant 0 : i32
    %c0_i32_1 = arith.constant 0 : i32
    return %c0_i32, %c0_i32_0 : i32, i32
  }
  func.func @transform_6(%arg0: i32) -> (i32, i32) {
    %c0_i32 = arith.constant 0 : i32
    %c0_i32_0 = arith.constant 0 : i32
    %c0_i32_1 = arith.constant 0 : i32
    return %c0_i32, %c0_i32_0 : i32, i32
  }
  func.func @transform_7(%arg0: i32) -> (i32, i32) {
    %c0_i32 = arith.constant 0 : i32
    %c0_i32_0 = arith.constant 0 : i32
    %c0_i32_1 = arith.constant 0 : i32
    return %c0_i32, %c0_i32_0 : i32, i32
  }
  func.func @transform_8(%arg0: i32) -> (i32, i32) {
    %c0_i32 = arith.constant 0 : i32
    %c0_i32_0 = arith.constant 0 : i32
    return %c0_i32, %arg0 : i32, i32
  }
}

</mosaic_0001>

<llo_original>
// kernel: _forward_impl.1
$region0: #{_forward_impl.1}
  #allocation0 [shape = 'u32[]', space=smem, size = 0x4, offset = 0x4, fixed_abs, tag = 'smem constant byte address 0x4 - core index']
  #allocation1 [shape = 'u32[72,128]{1,0:T(1,128)}', space=vmem, size = 0x9000, scoped, tag = 'internal scratch']
  #allocation2 [shape = 'f32[1,1]{1,0:T(1,128)S(1)}', space=vmem, size = 0x200, scoped, tag = 'scoped memory for _forward_impl.1']
  %s0 = inlined_call_operand.vmem [shape: f32[1,2048], index: 0, kind: input, shape index: {}]
  %s1 = inlined_call_operand.vmem [shape: f32[1,2048], index: 1, kind: input, shape index: {}]
  %s2 = inlined_call_operand.vmem [shape: f32[32,2], index: 2, kind: input, shape index: {}]
  %s3 = inlined_call_operand.vmem [shape: f32[32,1], index: 3, kind: input, shape index: {}]
  %s4 = inlined_call_operand.vmem [shape: f32[32,32], index: 4, kind: input, shape index: {}]
  %s5 = inlined_call_operand.vmem [shape: f32[32,1], index: 5, kind: input, shape index: {}]
  %s6 = inlined_call_operand.vmem [shape: f32[32,1], index: 6, kind: input, shape index: {}]
  %s7 = inlined_call_operand.<no memory space> [shape: f32[1,1], index: 7, kind: input, shape index: {}]
  %s8 = inlined_call_operand.hbm [shape: f32[1,2048], index: 8, kind: output, shape index: {}]
  %s9 = sld [smem:[#allocation0]]
  $region72: #{_forward_impl.1} parent=0
    _
  %s11 = ssub.s32 1, %s9
  %s12 = scalar_select 0, %s11, %s9
  %v13 = vstv %s7
  %14 = vst [vmem:[#allocation2] sm:$0x1] %v13
  $region1: #{_forward_impl.1} parent=0
    #allocation3 [shape = 'u8[8192]{0}', space=vmem, size = 0x2000, scoped, tag = 'output window, operand 0']
    #allocation4 [shape = 's32[2]{0}', space=sflag, size = 0x8, scoped, tag = 'scoped memory for _forward_impl.1']
    %15 = vsyncpa [#allocation4], 0
    %s16 = scalar_lea.sflag [#allocation4], 1
    %17 = vsyncpa %s16, 0
    loop: start=0, step=1, limit=4
    $region2: #{_forward_impl.1} parent=1 // loop_pre_header
      _
    $region3: #{_forward_impl.1} parent=1 // loop_header
      %s19 = sphi 0, %s23
      %p20 = scmp.ge.s32.totalorder %s19, 4
      %s29 = sphi 0, %s31
      %s32 = sphi 0, %s29
      %s33 = sphi 0, %s32
      %s49 = sphi 0, %s33
      %s55 = sphi 0, %s57
      %s58 = sphi 0, %s55
      %s59 = sphi 0, %s58
      %s75 = sphi 0, %s59
      %s79 = sphi 0, %s79
      %s81 = sphi 0, %s79
      %s82 = sphi 0, %s81
      %s96 = sphi 0, %s82
      %s100 = sphi 0, %s100
      %s102 = sphi 0, %s100
      %s103 = sphi 0, %s102
      %s117 = sphi 0, %s103
      %s121 = sphi 0, %s121
      %s123 = sphi 0, %s121
      %s124 = sphi 0, %s123
      %s138 = sphi 0, %s124
      %s142 = sphi 0, %s142
      %s144 = sphi 0, %s142
      %s145 = sphi 0, %s144
      %s159 = sphi 0, %s145
      %s163 = sphi 0, %s163
      %s165 = sphi 0, %s163
      %s166 = sphi 0, %s165
      %s180 = sphi 0, %s166
      %s184 = sphi 0, %s184
      %s186 = sphi 0, %s184
      %s187 = sphi 0, %s186
      %s201 = sphi 0, %s187
      %s207 = sphi 0, %s209
      %s210 = sphi 0, %s207
      %s211 = sphi 0, %s210
      %s227 = sphi 0, %s211
    $region4: #{_forward_impl.1} parent=1 // loop_header_branch
      %22 = sbr.rel (%p20) target = $region8
    $region5: #{_forward_impl.1} parent=1 // loop_body
      %s24 = ssub.s32 %s19, 1
      %s25 = ssub.s32 %s19, 2
      %s26 = sadd.s32 %s19, 1
      %s27 = ssub.s32 %s19, %s26
      %p28 = scmp.eq.s32.totalorder %s27, 0
      %s30 = sadd.s32 %s29, 1
      %s31 = scalar_select %p28, %s29, %s30
      %p34 = pneg %p28
      %p35 = scmp.eq.s32.totalorder %s19, 1
      %p36 = por %p34, %p35
      %p37 = scmp.ne.s32.totalorder %s29, %s32
      %p38 = scmp.eq.s32.totalorder %s19, 0
      %p39 = por %p37, %p38
      %p40 = scmp.ne.s32.totalorder %s29, %s32
      %p41 = scmp.eq.s32.totalorder %s24, 1
      %p42 = por %p40, %p41
      %p43 = scmp.ne.s32.totalorder %s32, %s33
      %p44 = scmp.eq.s32.totalorder %s24, 0
      %p45 = por %p43, %p44
      %p46 = scmp.ne.s32.totalorder %s32, %s33
      %p47 = scmp.eq.s32.totalorder %s25, 1
      %p48 = por %p46, %p47
      %p50 = scmp.ne.s32.totalorder %s33, %s49
      %p51 = scmp.eq.s32.totalorder %s25, 0
      %p52 = por %p50, %p51
      %s53 = ssub.s32 %s19, %s26
      %p54 = scmp.eq.s32.totalorder %s53, 0
      %s56 = sadd.s32 %s55, 1
      %s57 = scalar_select %p54, %s55, %s56
      %p60 = pneg %p54
      %p61 = scmp.eq.s32.totalorder %s19, 1
      %p62 = por %p60, %p61
      %p63 = scmp.ne.s32.totalorder %s55, %s58
      %p64 = scmp.eq.s32.totalorder %s19, 0
      %p65 = por %p63, %p64
      %p66 = scmp.ne.s32.totalorder %s55, %s58
      %p67 = scmp.eq.s32.totalorder %s24, 1
      %p68 = por %p66, %p67
      %p69 = scmp.ne.s32.totalorder %s58, %s59
      %p70 = scmp.eq.s32.totalorder %s24, 0
      %p71 = por %p69, %p70
      %p72 = scmp.ne.s32.totalorder %s58, %s59
      %p73 = scmp.eq.s32.totalorder %s25, 1
      %p74 = por %p72, %p73
      %p76 = scmp.ne.s32.totalorder %s59, %s75
      %p77 = scmp.eq.s32.totalorder %s25, 0
      %p78 = por %p76, %p77
      %s80 = sadd.s32 %s79, 1
      %p83 = scmp.eq.s32.totalorder %s19, 1
      %p84 = scmp.ne.s32.totalorder %s79, %s81
      %p85 = scmp.eq.s32.totalorder %s19, 0
      %p86 = por %p84, %p85
      %p87 = scmp.ne.s32.totalorder %s79, %s81
      %p88 = scmp.eq.s32.totalorder %s24, 1
      %p89 = por %p87, %p88
      %p90 = scmp.ne.s32.totalorder %s81, %s82
      %p91 = scmp.eq.s32.totalorder %s24, 0
      %p92 = por %p90, %p91
      %p93 = scmp.ne.s32.totalorder %s81, %s82
      %p94 = scmp.eq.s32.totalorder %s25, 1
      %p95 = por %p93, %p94
      %p97 = scmp.ne.s32.totalorder %s82, %s96
      %p98 = scmp.eq.s32.totalorder %s25, 0
      %p99 = por %p97, %p98
      %s101 = sadd.s32 %s100, 1
      %p104 = scmp.eq.s32.totalorder %s19, 1
      %p105 = scmp.ne.s32.totalorder %s100, %s102
      %p106 = scmp.eq.s32.totalorder %s19, 0
      %p107 = por %p105, %p106
      %p108 = scmp.ne.s32.totalorder %s100, %s102
      %p109 = scmp.eq.s32.totalorder %s24, 1
      %p110 = por %p108, %p109
      %p111 = scmp.ne.s32.totalorder %s102, %s103
      %p112 = scmp.eq.s32.totalorder %s24, 0
      %p113 = por %p111, %p112
      %p114 = scmp.ne.s32.totalorder %s102, %s103
      %p115 = scmp.eq.s32.totalorder %s25, 1
      %p116 = por %p114, %p115
      %p118 = scmp.ne.s32.totalorder %s103, %s117
      %p119 = scmp.eq.s32.totalorder %s25, 0
      %p120 = por %p118, %p119
      %s122 = sadd.s32 %s121, 1
      %p125 = scmp.eq.s32.totalorder %s19, 1
      %p126 = scmp.ne.s32.totalorder %s121, %s123
      %p127 = scmp.eq.s32.totalorder %s19, 0
      %p128 = por %p126, %p127
      %p129 = scmp.ne.s32.totalorder %s121, %s123
      %p130 = scmp.eq.s32.totalorder %s24, 1
      %p131 = por %p129, %p130
      %p132 = scmp.ne.s32.totalorder %s123, %s124
      %p133 = scmp.eq.s32.totalorder %s24, 0
      %p134 = por %p132, %p133
      %p135 = scmp.ne.s32.totalorder %s123, %s124
      %p136 = scmp.eq.s32.totalorder %s25, 1
      %p137 = por %p135, %p136
      %p139 = scmp.ne.s32.totalorder %s124, %s138
      %p140 = scmp.eq.s32.totalorder %s25, 0
      %p141 = por %p139, %p140
      %s143 = sadd.s32 %s142, 1
      %p146 = scmp.eq.s32.totalorder %s19, 1
      %p147 = scmp.ne.s32.totalorder %s142, %s144
      %p148 = scmp.eq.s32.totalorder %s19, 0
      %p149 = por %p147, %p148
      %p150 = scmp.ne.s32.totalorder %s142, %s144
      %p151 = scmp.eq.s32.totalorder %s24, 1
      %p152 = por %p150, %p151
      %p153 = scmp.ne.s32.totalorder %s144, %s145
      %p154 = scmp.eq.s32.totalorder %s24, 0
      %p155 = por %p153, %p154
      %p156 = scmp.ne.s32.totalorder %s144, %s145
      %p157 = scmp.eq.s32.totalorder %s25, 1
      %p158 = por %p156, %p157
      %p160 = scmp.ne.s32.totalorder %s145, %s159
      %p161 = scmp.eq.s32.totalorder %s25, 0
      %p162 = por %p160, %p161
      %s164 = sadd.s32 %s163, 1
      %p167 = scmp.eq.s32.totalorder %s19, 1
      %p168 = scmp.ne.s32.totalorder %s163, %s165
      %p169 = scmp.eq.s32.totalorder %s19, 0
      %p170 = por %p168, %p169
      %p171 = scmp.ne.s32.totalorder %s163, %s165
      %p172 = scmp.eq.s32.totalorder %s24, 1
      %p173 = por %p171, %p172
      %p174 = scmp.ne.s32.totalorder %s165, %s166
      %p175 = scmp.eq.s32.totalorder %s24, 0
      %p176 = por %p174, %p175
      %p177 = scmp.ne.s32.totalorder %s165, %s166
      %p178 = scmp.eq.s32.totalorder %s25, 1
      %p179 = por %p177, %p178
      %p181 = scmp.ne.s32.totalorder %s166, %s180
      %p182 = scmp.eq.s32.totalorder %s25, 0
      %p183 = por %p181, %p182
      %s185 = sadd.s32 %s184, 1
      %p188 = scmp.eq.s32.totalorder %s19, 1
      %p189 = scmp.ne.s32.totalorder %s184, %s186
      %p190 = scmp.eq.s32.totalorder %s19, 0
      %p191 = por %p189, %p190
      %p192 = scmp.ne.s32.totalorder %s184, %s186
      %p193 = scmp.eq.s32.totalorder %s24, 1
      %p194 = por %p192, %p193
      %p195 = scmp.ne.s32.totalorder %s186, %s187
      %p196 = scmp.eq.s32.totalorder %s24, 0
      %p197 = por %p195, %p196
      %p198 = scmp.ne.s32.totalorder %s186, %s187
      %p199 = scmp.eq.s32.totalorder %s25, 1
      %p200 = por %p198, %p199
      %p202 = scmp.ne.s32.totalorder %s187, %s201
      %p203 = scmp.eq.s32.totalorder %s25, 0
      %p204 = por %p202, %p203
      %s205 = ssub.s32 %s19, %s26
      %p206 = scmp.eq.s32.totalorder %s205, 0
      %s208 = sadd.s32 %s207, 1
      %s209 = scalar_select %p206, %s207, %s208
      %p212 = pneg %p206
      %p213 = scmp.eq.s32.totalorder %s19, 1
      %p214 = por %p212, %p213
      %p215 = scmp.ne.s32.totalorder %s207, %s210
      %p216 = scmp.eq.s32.totalorder %s19, 0
      %p217 = por %p215, %p216
      %p218 = scmp.ne.s32.totalorder %s207, %s210
      %p219 = scmp.eq.s32.totalorder %s24, 1
      %p220 = por %p218, %p219
      %p221 = scmp.ne.s32.totalorder %s210, %s211
      %p222 = scmp.eq.s32.totalorder %s24, 0
      %p223 = por %p221, %p222
      %p224 = scmp.ne.s32.totalorder %s210, %s211
      %p225 = scmp.eq.s32.totalorder %s25, 1
      %p226 = por %p224, %p225
      %p228 = scmp.ne.s32.totalorder %s211, %s227
      %p229 = scmp.eq.s32.totalorder %s25, 0
      %p230 = por %p228, %p229
      %p231 = scmp.le.s32.totalorder 1, %s19
      %p232 = scmp.lt.s32.totalorder %s19, 3
      %p233 = pnand %p231, %p232
      %p234 = pneg %p233
      // Predicated region
      $region9: #{_forward_impl.1} parent=5 // pred_check
        _
      $region10: #{_forward_impl.1} parent=5 // pred_check_branch
        %236 = sbr.rel (%p233) target = $region12
      $region11: #{_forward_impl.1} parent=5 // pred_region
        %s237 = ssub.s32 %s19, 1
        // Predicated region
        $region13: #{_forward_impl.1} parent=11 // pred_check
          %p238 = pneg %p92
        $region14: #{_forward_impl.1} parent=11 // pred_check_branch
          %240 = sbr.rel (%p238) target = $region16
        $region15: #{_forward_impl.1} parent=11 // pred_region
          _
        $region16: #{_forward_impl.1} parent=11 // pred_fallthru
          _
        // Predicated region
        $region17: #{_forward_impl.1} parent=11 // pred_check
          %p241 = pneg %p113
        $region18: #{_forward_impl.1} parent=11 // pred_check_branch
          %243 = sbr.rel (%p241) target = $region20
        $region19: #{_forward_impl.1} parent=11 // pred_region
          _
        $region20: #{_forward_impl.1} parent=11 // pred_fallthru
          _
        // Predicated region
        $region21: #{_forward_impl.1} parent=11 // pred_check
          %p244 = pneg %p134
        $region22: #{_forward_impl.1} parent=11 // pred_check_branch
          %246 = sbr.rel (%p244) target = $region24
        $region23: #{_forward_impl.1} parent=11 // pred_region
          _
        $region24: #{_forward_impl.1} parent=11 // pred_fallthru
          _
        // Predicated region
        $region25: #{_forward_impl.1} parent=11 // pred_check
          %p247 = pneg %p155
        $region26: #{_forward_impl.1} parent=11 // pred_check_branch
          %249 = sbr.rel (%p247) target = $region28
        $region27: #{_forward_impl.1} parent=11 // pred_region
          _
        $region28: #{_forward_impl.1} parent=11 // pred_fallthru
          _
        // Predicated region
        $region29: #{_forward_impl.1} parent=11 // pred_check
          %p250 = pneg %p176
        $region30: #{_forward_impl.1} parent=11 // pred_check_branch
          %252 = sbr.rel (%p250) target = $region32
        $region31: #{_forward_impl.1} parent=11 // pred_region
          _
        $region32: #{_forward_impl.1} parent=11 // pred_fallthru
          _
        // Predicated region
        $region33: #{_forward_impl.1} parent=11 // pred_check
          %p253 = pneg %p197
        $region34: #{_forward_impl.1} parent=11 // pred_check_branch
          %255 = sbr.rel (%p253) target = $region36
        $region35: #{_forward_impl.1} parent=11 // pred_region
          _
        $region36: #{_forward_impl.1} parent=11 // pred_fallthru
          _
      $region12: #{_forward_impl.1} parent=5 // pred_fallthru
        _
      %p256 = scmp.lt.s32.totalorder %s19, 2
      // Predicated region
      $region37: #{_forward_impl.1} parent=5 // pred_check
        %p257 = pneg %p256
      $region38: #{_forward_impl.1} parent=5 // pred_check_branch
        %259 = sbr.rel (%p257) target = $region40
      $region39: #{_forward_impl.1} parent=5 // pred_region
        // Predicated region
        $region41: #{_forward_impl.1} parent=39 // pred_check
          %p260 = pneg %p39
        $region42: #{_forward_impl.1} parent=39 // pred_check_branch
          %262 = sbr.rel (%p260) target = $region44
        $region43: #{_forward_impl.1} parent=39 // pred_region
          %s263 = smul.u32 8, %s19
          %p264 = scmp.lt.s32.totalorder %s263, 15
          %s265 = scalar_select %p264, %s263, 15
          %s266 = scalar_lea.vmem %s0, %s265
          %s267 = smul.u32 8, %s19
        $region44: #{_forward_impl.1} parent=39 // pred_fallthru
          _
        // Predicated region
        $region45: #{_forward_impl.1} parent=39 // pred_check
          %p268 = pneg %p65
        $region46: #{_forward_impl.1} parent=39 // pred_check_branch
          %270 = sbr.rel (%p268) target = $region48
        $region47: #{_forward_impl.1} parent=39 // pred_region
          %s271 = smul.u32 8, %s19
          %p272 = scmp.lt.s32.totalorder %s271, 15
          %s273 = scalar_select %p272, %s271, 15
          %s274 = scalar_lea.vmem %s1, %s273
          %s275 = smul.u32 8, %s19
        $region48: #{_forward_impl.1} parent=39 // pred_fallthru
          _
      $region40: #{_forward_impl.1} parent=5 // pred_fallthru
        _
      %p276 = scmp.le.s32.totalorder 1, %s19
      %p277 = scmp.lt.s32.totalorder %s19, 3
      %p278 = pnand %p276, %p277
      %p279 = pneg %p278
      // Predicated region
      $region49: #{_forward_impl.1} parent=5 // pred_check
        _
      $region50: #{_forward_impl.1} parent=5 // pred_check_branch
        %281 = sbr.rel (%p278) target = $region52
      $region51: #{_forward_impl.1} parent=5 // pred_region
        %s282 = ssub.s32 %s19, 1
        %s283 = smul.u32 8, %s24
        %p284 = scmp.lt.s32.totalorder %s283, 15
        %s285 = scalar_select %p284, %s283, 15
        %s286 = scalar_lea.vmem %s0, %s285
        %p287 = pneg %p45
        %p288 = pneg %p42
        %s289 = smul.u32 8, %s24
        %p290 = scmp.lt.s32.totalorder %s289, 15
        %s291 = scalar_select %p290, %s289, 15
        %s292 = scalar_lea.vmem %s1, %s291
        %p293 = pneg %p71
        %p294 = pneg %p68
        %p295 = pneg %p92
        %p296 = pneg %p89
        %p297 = pneg %p113
        %p298 = pneg %p110
        %p299 = pneg %p134
        %p300 = pneg %p131
        %p301 = pneg %p155
        %p302 = pneg %p152
        %p303 = pneg %p176
        %p304 = pneg %p173
        %p305 = pneg %p197
        %p306 = pneg %p194
        %p307 = pneg %p223
        %p308 = pneg %p220
        %s309 = sand.u32 %s210, 1
        %s310 = scalar_lea.sflag [#allocation4], %s309
        %s311 = sand.u32 %s210, 1
        %s312 = smul.addr %s311, 8
        %s313 = scalar_lea.vmem [#allocation3], %s312
        %s314 = smul.u32 8, %s24
        %p315 = scmp.lt.s32.totalorder %s314, 15
        %s316 = scalar_select %p315, %s314, 15
        %s317 = scalar_lea.vmem %s0, %s316
        %s318 = smul.u32 8, %s24
        %s319 = smul.u32 8, %s24
        %p320 = scmp.lt.s32.totalorder %s319, 15
        %s321 = scalar_select %p320, %s319, 15
        %s322 = scalar_lea.vmem %s1, %s321
        %s323 = smul.u32 8, %s24
        %s324 = smul.u32 8, %s24
        %v325 = vld [vmem:[%s2] sm:$0xff]
        %v326 = vld [vmem:[%s2 + $0x8] sm:$0xff]
        %v327 = vld [vmem:[%s2 + $0x10] sm:$0xff]
        %v328 = vld [vmem:[%s2 + $0x18] sm:$0xff]
        %v329 = vld [vmem:[%s4] sm:$0xff]
        %v330 = vld [vmem:[%s4 + $0x8] sm:$0xff]
        %v331 = vld [vmem:[%s4 + $0x10] sm:$0xff]
        %v332 = vld [vmem:[%s4 + $0x18] sm:$0xff]
        %v333 = vld [vmem:[%s6] sm:$0xff]
        %v334 = vld [vmem:[%s6 + $0x8] sm:$0xff]
        %v335 = vld [vmem:[%s6 + $0x10] sm:$0xff]
        %v336 = vld [vmem:[%s6 + $0x18] sm:$0xff]
        %v337 = vld [vmem:[%s3] sm:$0xff]
        %v338 = vld [vmem:[%s3 + $0x8] sm:$0xff]
        %v339 = vld [vmem:[%s3 + $0x10] sm:$0xff]
        %v340 = vld [vmem:[%s3 + $0x18] sm:$0xff]
        %v341 = vld [vmem:[%s5] sm:$0xff]
        %v342 = vld [vmem:[%s5 + $0x8] sm:$0xff]
        %v343 = vld [vmem:[%s5 + $0x10] sm:$0xff]
        %v344 = vld [vmem:[%s5 + $0x18] sm:$0xff]
        %v345 = vld [vmem:[#allocation2] sm:$0x1]
        loop: start=0, step=1, limit=2
        $region53: #{_forward_impl.1} parent=51 // loop_pre_header
          _
        $region54: #{_forward_impl.1} parent=51 // loop_header
          %s347 = sphi 0, %s351
          %p348 = scmp.ge.s32.totalorder %s347, 2
        $region55: #{_forward_impl.1} parent=51 // loop_header_branch
          %350 = sbr.rel (%p348) target = $region59
        $region56: #{_forward_impl.1} parent=51 // loop_body
          %s352 = smul.u32 %s347, 512
          %s353 = sshra.s32 %s352, 7
          %s354 = sand.u32 %s352, 127
          %s355 = scalar_lea.vmem %s317, %s353
          %v356 = vld [vmem:[%s355] sm:$0xf]
          %358 = vset.pattern.permute.xlu0 0
          %359 = vperm.xlu0 %358, %v325
          %v360 = vpop.permute.xlu0 %359
          %363 = vset.pattern.permute.xlu0 0
          %364 = vperm.xlu0 %363, %v326
          %v365 = vpop.permute.xlu0 %364
          %368 = vset.pattern.permute.xlu0 0
          %369 = vperm.xlu0 %368, %v327
          %v370 = vpop.permute.xlu0 %369
          %373 = vset.pattern.permute.xlu0 0
          %374 = vperm.xlu0 %373, %v328
          %v375 = vpop.permute.xlu0 %374
          %v378 = vperm.slane %v356, 0
          %v379 = vperm.slane %v356, 1
          %v380 = vperm.slane %v356, 2
          %v381 = vperm.slane %v356, 3
          %v386 = vmul.f32 %v360, %v378
          %v387 = vmul.f32 %v360, %v379
          %v388 = vmul.f32 %v360, %v380
          %v389 = vmul.f32 %v360, %v381
          %v390 = vmul.f32 %v365, %v378
          %v391 = vmul.f32 %v365, %v379
          %v392 = vmul.f32 %v365, %v380
          %v393 = vmul.f32 %v365, %v381
          %v394 = vmul.f32 %v370, %v378
          %v395 = vmul.f32 %v370, %v379
          %v396 = vmul.f32 %v370, %v380
          %v397 = vmul.f32 %v370, %v381
          %v398 = vmul.f32 %v375, %v378
          %v399 = vmul.f32 %v375, %v379
          %v400 = vmul.f32 %v375, %v380
          %v401 = vmul.f32 %v375, %v381
          %s402 = scalar_lea.vmem %s322, %s353
          %v403 = vld [vmem:[%s402] sm:$0xf]
          %404 = vset.pattern.permute.xlu0 1
          %405 = vperm.xlu0 %404, %v325
          %v406 = vpop.permute.xlu0 %405
          %408 = vset.pattern.permute.xlu0 1
          %409 = vperm.xlu0 %408, %v326
          %v410 = vpop.permute.xlu0 %409
          %412 = vset.pattern.permute.xlu0 1
          %413 = vperm.xlu0 %412, %v327
          %v414 = vpop.permute.xlu0 %413
          %416 = vset.pattern.permute.xlu0 1
          %417 = vperm.xlu0 %416, %v328
          %v418 = vpop.permute.xlu0 %417
          %v421 = vperm.slane %v403, 0
          %v422 = vperm.slane %v403, 1
          %v423 = vperm.slane %v403, 2
          %v424 = vperm.slane %v403, 3
          %v429 = vmul.f32 %v406, %v421
          %v430 = vmul.f32 %v406, %v422
          %v431 = vmul.f32 %v406, %v423
          %v432 = vmul.f32 %v406, %v424
          %v433 = vmul.f32 %v410, %v421
          %v434 = vmul.f32 %v410, %v422
          %v435 = vmul.f32 %v410, %v423
          %v436 = vmul.f32 %v410, %v424
          %v437 = vmul.f32 %v414, %v421
          %v438 = vmul.f32 %v414, %v422
          %v439 = vmul.f32 %v414, %v423
          %v440 = vmul.f32 %v414, %v424
          %v441 = vmul.f32 %v418, %v421
          %v442 = vmul.f32 %v418, %v422
          %v443 = vmul.f32 %v418, %v423
          %v444 = vmul.f32 %v418, %v424
          %v445 = vadd.f32 %v386, %v429
          %v446 = vadd.f32 %v387, %v430
          %v447 = vadd.f32 %v388, %v431
          %v448 = vadd.f32 %v389, %v432
          %v449 = vadd.f32 %v390, %v433
          %v450 = vadd.f32 %v391, %v434
          %v451 = vadd.f32 %v392, %v435
          %v452 = vadd.f32 %v393, %v436
          %v453 = vadd.f32 %v394, %v437
          %v454 = vadd.f32 %v395, %v438
          %v455 = vadd.f32 %v396, %v439
          %v456 = vadd.f32 %v397, %v440
          %v457 = vadd.f32 %v398, %v441
          %v458 = vadd.f32 %v399, %v442
          %v459 = vadd.f32 %v400, %v443
          %v460 = vadd.f32 %v401, %v444
          %462 = vset.pattern.permute.xlu0 0
          %463 = vperm.xlu0 %462, %v337
          %v464 = vpop.permute.xlu0 %463
          %467 = vset.pattern.permute.xlu0 0
          %468 = vperm.xlu0 %467, %v338
          %v469 = vpop.permute.xlu0 %468
          %472 = vset.pattern.permute.xlu0 0
          %473 = vperm.xlu0 %472, %v339
          %v474 = vpop.permute.xlu0 %473
          %477 = vset.pattern.permute.xlu0 0
          %478 = vperm.xlu0 %477, %v340
          %v479 = vpop.permute.xlu0 %478
          %v481 = vadd.f32 %v445, %v464
          %v482 = vadd.f32 %v446, %v464
          %v483 = vadd.f32 %v447, %v464
          %v484 = vadd.f32 %v448, %v464
          %v485 = vadd.f32 %v449, %v469
          %v486 = vadd.f32 %v450, %v469
          %v487 = vadd.f32 %v451, %v469
          %v488 = vadd.f32 %v452, %v469
          %v489 = vadd.f32 %v453, %v474
          %v490 = vadd.f32 %v454, %v474
          %v491 = vadd.f32 %v455, %v474
          %v492 = vadd.f32 %v456, %v474
          %v493 = vadd.f32 %v457, %v479
          %v494 = vadd.f32 %v458, %v479
          %v495 = vadd.f32 %v459, %v479
          %v496 = vadd.f32 %v460, %v479
          %v497 = vtanh.pop %v481
          %v498 = vtanh.pop %v482
          %v499 = vtanh.pop %v483
          %v500 = vtanh.pop %v484
          %v501 = vtanh.pop %v485
          %v502 = vtanh.pop %v486
          %v503 = vtanh.pop %v487
          %v504 = vtanh.pop %v488
          %v505 = vtanh.pop %v489
          %v506 = vtanh.pop %v490
          %v507 = vtanh.pop %v491
          %v508 = vtanh.pop %v492
          %v509 = vtanh.pop %v493
          %v510 = vtanh.pop %v494
          %v511 = vtanh.pop %v495
          %v512 = vtanh.pop %v496
          %514 = vset.pattern.permute.xlu0 0
          %515 = vperm.xlu0 %514, %v341
          %v516 = vpop.permute.xlu0 %515
          %519 = vset.pattern.permute.xlu0 0
          %520 = vperm.xlu0 %519, %v342
          %v521 = vpop.permute.xlu0 %520
          %524 = vset.pattern.permute.xlu0 0
          %525 = vperm.xlu0 %524, %v343
          %v526 = vpop.permute.xlu0 %525
          %529 = vset.pattern.permute.xlu0 0
          %530 = vperm.xlu0 %529, %v344
          %v531 = vpop.permute.xlu0 %530
          %vm533 = vcmask 261120
          %v535 = vsel %vm533, %v329, 0
          %v538 = vsel %vm533, %v330, 0
          %v541 = vsel %vm533, %v331, 0
          %v544 = vsel %vm533, %v332, 0
          %546 = vmatpush.msra.mxu0 0.0
          %547 = vmatpush.msra.mxu0 0.0
          %548 = vmatpush.msra.mxu0 0.0
          %549 = vmatpush.msra.mxu0 0.0
          %550 = vmatpush.msra.mxu0 0.0
          %551 = vmatpush.msra.mxu0 0.0
          %552 = vmatpush.msra.mxu0 0.0
          %553 = vmatpush.msra.mxu0 0.0
          %554 = vmatpush.msra.mxu0 0.0
          %555 = vmatpush.msra.mxu0 0.0
          %556 = vmatpush.msra.mxu0 0.0
          %557 = vmatpush.msra.mxu0 0.0
          %558 = vmatpush.msra.mxu0 %v509
          %559 = vmatpush.msra.mxu0 %v505
          %560 = vmatpush.msra.mxu0 %v501
          %561 = vmatpush.msra.mxu0 %v497
          %562 = vmatmul.f32.gmra.mxu0 %v535
          %v563 = vpop.f32.mrf.mxu0
          %v564 = vadd.f32 %v516, %v563
          %565 = vmatmul.f32.gmra.mxu0 %v538
          %v566 = vpop.f32.mrf.mxu0
          %v567 = vadd.f32 %v521, %v566
          %568 = vmatmul.f32.gmra.mxu0 %v541
          %v569 = vpop.f32.mrf.mxu0
          %v570 = vadd.f32 %v526, %v569
          %571 = vmatmul.f32.gmra.mxu0 %v544
          %v572 = vpop.f32.mrf.mxu0
          %v573 = vadd.f32 %v531, %v572
          %574 = vdwg.mxu0
          %575 = vmatpush.msra.mxu0 0.0
          %576 = vmatpush.msra.mxu0 0.0
          %577 = vmatpush.msra.mxu0 0.0
          %578 = vmatpush.msra.mxu0 0.0
          %579 = vmatpush.msra.mxu0 0.0
          %580 = vmatpush.msra.mxu0 0.0
          %581 = vmatpush.msra.mxu0 0.0
          %582 = vmatpush.msra.mxu0 0.0
          %583 = vmatpush.msra.mxu0 0.0
          %584 = vmatpush.msra.mxu0 0.0
          %585 = vmatpush.msra.mxu0 0.0
          %586 = vmatpush.msra.mxu0 0.0
          %587 = vmatpush.msra.mxu0 %v510
          %588 = vmatpush.msra.mxu0 %v506
          %589 = vmatpush.msra.mxu0 %v502
          %590 = vmatpush.msra.mxu0 %v498
          %591 = vmatmul.f32.gmra.mxu0 %v535
          %v592 = vpop.f32.mrf.mxu0
          %v593 = vadd.f32 %v516, %v592
          %594 = vmatmul.f32.gmra.mxu0 %v538
          %v595 = vpop.f32.mrf.mxu0
          %v596 = vadd.f32 %v521, %v595
          %597 = vmatmul.f32.gmra.mxu0 %v541
          %v598 = vpop.f32.mrf.mxu0
          %v599 = vadd.f32 %v526, %v598
          %600 = vmatmul.f32.gmra.mxu0 %v544
          %v601 = vpop.f32.mrf.mxu0
          %v602 = vadd.f32 %v531, %v601
          %603 = vdwg.mxu0
          %604 = vmatpush.msra.mxu0 0.0
          %605 = vmatpush.msra.mxu0 0.0
          %606 = vmatpush.msra.mxu0 0.0
          %607 = vmatpush.msra.mxu0 0.0
          %608 = vmatpush.msra.mxu0 0.0
          %609 = vmatpush.msra.mxu0 0.0
          %610 = vmatpush.msra.mxu0 0.0
          %611 = vmatpush.msra.mxu0 0.0
          %612 = vmatpush.msra.mxu0 0.0
          %613 = vmatpush.msra.mxu0 0.0
          %614 = vmatpush.msra.mxu0 0.0
          %615 = vmatpush.msra.mxu0 0.0
          %616 = vmatpush.msra.mxu0 %v511
          %617 = vmatpush.msra.mxu0 %v507
          %618 = vmatpush.msra.mxu0 %v503
          %619 = vmatpush.msra.mxu0 %v499
          %620 = vmatmul.f32.gmra.mxu0 %v535
          %v621 = vpop.f32.mrf.mxu0
          %v622 = vadd.f32 %v516, %v621
          %623 = vmatmul.f32.gmra.mxu0 %v538
          %v624 = vpop.f32.mrf.mxu0
          %v625 = vadd.f32 %v521, %v624
          %626 = vmatmul.f32.gmra.mxu0 %v541
          %v627 = vpop.f32.mrf.mxu0
          %v628 = vadd.f32 %v526, %v627
          %629 = vmatmul.f32.gmra.mxu0 %v544
          %v630 = vpop.f32.mrf.mxu0
          %v631 = vadd.f32 %v531, %v630
          %632 = vdwg.mxu0
          %633 = vmatpush.msra.mxu0 0.0
          %634 = vmatpush.msra.mxu0 0.0
          %635 = vmatpush.msra.mxu0 0.0
          %636 = vmatpush.msra.mxu0 0.0
          %637 = vmatpush.msra.mxu0 0.0
          %638 = vmatpush.msra.mxu0 0.0
          %639 = vmatpush.msra.mxu0 0.0
          %640 = vmatpush.msra.mxu0 0.0
          %641 = vmatpush.msra.mxu0 0.0
          %642 = vmatpush.msra.mxu0 0.0
          %643 = vmatpush.msra.mxu0 0.0
          %644 = vmatpush.msra.mxu0 0.0
          %645 = vmatpush.msra.mxu0 %v512
          %646 = vmatpush.msra.mxu0 %v508
          %647 = vmatpush.msra.mxu0 %v504
          %648 = vmatpush.msra.mxu0 %v500
          %649 = vmatmul.f32.gmra.mxu0 %v535
          %v650 = vpop.f32.mrf.mxu0
          %v651 = vadd.f32 %v516, %v650
          %652 = vmatmul.f32.gmra.mxu0 %v538
          %v653 = vpop.f32.mrf.mxu0
          %v654 = vadd.f32 %v521, %v653
          %655 = vmatmul.f32.gmra.mxu0 %v541
          %v656 = vpop.f32.mrf.mxu0
          %v657 = vadd.f32 %v526, %v656
          %658 = vmatmul.f32.gmra.mxu0 %v544
          %v659 = vpop.f32.mrf.mxu0
          %v660 = vadd.f32 %v531, %v659
          %661 = vdwg.mxu0
          %v662 = vtanh.pop %v564
          %v663 = vtanh.pop %v593
          %v664 = vtanh.pop %v622
          %v665 = vtanh.pop %v651
          %v666 = vtanh.pop %v567
          %v667 = vtanh.pop %v596
          %v668 = vtanh.pop %v625
          %v669 = vtanh.pop %v654
          %v670 = vtanh.pop %v570
          %v671 = vtanh.pop %v599
          %v672 = vtanh.pop %v628
          %v673 = vtanh.pop %v657
          %v674 = vtanh.pop %v573
          %v675 = vtanh.pop %v602
          %v676 = vtanh.pop %v631
          %v677 = vtanh.pop %v660
          %679 = vset.pattern.permute.xlu0 0
          %680 = vperm.xlu0 %679, %v333
          %v681 = vpop.permute.xlu0 %680
          %684 = vset.pattern.permute.xlu0 0
          %685 = vperm.xlu0 %684, %v334
          %v686 = vpop.permute.xlu0 %685
          %689 = vset.pattern.permute.xlu0 0
          %690 = vperm.xlu0 %689, %v335
          %v691 = vpop.permute.xlu0 %690
          %694 = vset.pattern.permute.xlu0 0
          %695 = vperm.xlu0 %694, %v336
          %v696 = vpop.permute.xlu0 %695
          %v698 = vmul.f32 %v681, %v662
          %v699 = vmul.f32 %v681, %v663
          %v700 = vmul.f32 %v681, %v664
          %v701 = vmul.f32 %v681, %v665
          %v702 = vmul.f32 %v686, %v666
          %v703 = vmul.f32 %v686, %v667
          %v704 = vmul.f32 %v686, %v668
          %v705 = vmul.f32 %v686, %v669
          %v706 = vmul.f32 %v691, %v670
          %v707 = vmul.f32 %v691, %v671
          %v708 = vmul.f32 %v691, %v672
          %v709 = vmul.f32 %v691, %v673
          %v710 = vmul.f32 %v696, %v674
          %v711 = vmul.f32 %v696, %v675
          %v712 = vmul.f32 %v696, %v676
          %v713 = vmul.f32 %v696, %v677
          %v714 = vadd.f32 %v698, %v702
          %v715 = vadd.f32 %v714, %v706
          %v716 = vadd.f32 %v715, %v710
          %v717 = vrot.slane %v716, 4
          %v718 = vadd.f32 %v716, %v717
          %v719 = vrot.slane %v718, 2
          %v720 = vadd.f32 %v718, %v719
          %v721 = vrot.slane %v720, 1
          %v722 = vadd.f32 %v720, %v721
          %v723 = vadd.f32 %v699, %v703
          %v724 = vadd.f32 %v723, %v707
          %v725 = vadd.f32 %v724, %v711
          %v726 = vrot.slane %v725, 4
          %v727 = vadd.f32 %v725, %v726
          %v728 = vrot.slane %v727, 2
          %v729 = vadd.f32 %v727, %v728
          %v730 = vrot.slane %v729, 1
          %v731 = vadd.f32 %v729, %v730
          %v732 = vadd.f32 %v700, %v704
          %v733 = vadd.f32 %v732, %v708
          %v734 = vadd.f32 %v733, %v712
          %v735 = vrot.slane %v734, 4
          %v736 = vadd.f32 %v734, %v735
          %v737 = vrot.slane %v736, 2
          %v738 = vadd.f32 %v736, %v737
          %v739 = vrot.slane %v738, 1
          %v740 = vadd.f32 %v738, %v739
          %v741 = vadd.f32 %v701, %v705
          %v742 = vadd.f32 %v741, %v709
          %v743 = vadd.f32 %v742, %v713
          %v744 = vrot.slane %v743, 4
          %v745 = vadd.f32 %v743, %v744
          %v746 = vrot.slane %v745, 2
          %v747 = vadd.f32 %v745, %v746
          %v748 = vrot.slane %v747, 1
          %v749 = vadd.f32 %v747, %v748
          %751 = vset.pattern.permute.xlu0 0
          %752 = vperm.xlu0 %751, %v345
          %v753 = vpop.permute.xlu0 %752
          %v755 = vperm.slane %v753, 0
          %v756 = vadd.f32 %v722, %v755
          %v757 = vadd.f32 %v731, %v755
          %v758 = vadd.f32 %v740, %v755
          %v759 = vadd.f32 %v749, %v755
          %v764 = vrot.slane %v757, 7
          %v765 = vrot.slane %v758, 6
          %v766 = vrot.slane %v759, 5
          %vm767 = vcmask 1040384
          %v768 = vsel %vm767, %v756, %v764
          %vm769 = vcmask 1042434
          %v770 = vsel %vm769, %v765, %v766
          %vm771 = vcmask 1041408
          %v772 = vsel %vm771, %v768, %v770
          %s774 = scalar_lea.vmem %s313, %s353 [#allocation3]
          %v775 = vlaneseq
          %vm776 = vcmp.ge.s32.totalorder %v775, 0
          %vm777 = vcmp.lt.s32.totalorder %v775, 512
          %vm778 = vmand %vm776, %vm777
          %779 = vst.msk [vmem:[%s774] sm:$0xf] %vm778, %v772
        $region57: #{_forward_impl.1} parent=51 // loop_footer
          %s351 = sadd.s32 1, %s347
        $region58: #{_forward_impl.1} parent=51 // loop_footer_branch
          %346 = sbr.rel target = $region54
        $region59: #{_forward_impl.1} parent=51 // loop_exit
          _
        %s780 = sand.u32 %s210, 1
        %s781 = scalar_lea.sflag [#allocation4], %s780
        %s782 = sand.u32 %s210, 1
        %s783 = smul.addr %s782, 8
        %s784 = scalar_lea.vmem [#allocation3], %s783
        // Predicated region
        $region60: #{_forward_impl.1} parent=51 // pred_check
          %p785 = pneg %p220
        $region61: #{_forward_impl.1} parent=51 // pred_check_branch
          %787 = sbr.rel (%p785) target = $region63
        $region62: #{_forward_impl.1} parent=51 // pred_region
          %s788 = smul.u32 8, %s24
          %790 = vsyncadd %s781, 0
          %s791 = scalar_lea.hbm %s8, %s788
          %s793 = sshll.u32 %s784, 4
          %s794 = int_to_ptr.vmem [resolvable:$true] %s793
          %s795 = sshll.u32 %s791, 4
          %s796 = int_to_ptr.hbm [resolvable:$true] %s795
          %798 = dma.vmem_to_hbm [thread:$0]  %s794, 128, %s796, %s781
        $region63: #{_forward_impl.1} parent=51 // pred_fallthru
          _
      $region52: #{_forward_impl.1} parent=5 // pred_fallthru
        _
      %p799 = scmp.le.s32.totalorder 2, %s19
      // Predicated region
      $region64: #{_forward_impl.1} parent=5 // pred_check
        %p800 = pneg %p799
      $region65: #{_forward_impl.1} parent=5 // pred_check_branch
        %802 = sbr.rel (%p800) target = $region67
      $region66: #{_forward_impl.1} parent=5 // pred_region
        %s803 = ssub.s32 %s19, 2
        // Predicated region
        $region68: #{_forward_impl.1} parent=66 // pred_check
          %p804 = pneg %p226
        $region69: #{_forward_impl.1} parent=66 // pred_check_branch
          %806 = sbr.rel (%p804) target = $region71
        $region70: #{_forward_impl.1} parent=66 // pred_region
          %s807 = sand.u32 %s211, 1
          %s808 = scalar_lea.sflag [#allocation4], %s807
          %s809 = sand.u32 %s211, 1
          %s810 = smul.addr %s809, 8
          %s811 = scalar_lea.vmem [#allocation3], %s810
          %813 = dma.done %s808, 128
        $region71: #{_forward_impl.1} parent=66 // pred_fallthru
          _
      $region67: #{_forward_impl.1} parent=5 // pred_fallthru
        _
    $region6: #{_forward_impl.1} parent=1 // loop_footer
      %s23 = sadd.s32 1, %s19
    $region7: #{_forward_impl.1} parent=1 // loop_footer_branch
      %18 = sbr.rel target = $region3
    $region8: #{_forward_impl.1} parent=1 // loop_exit
      _
    %814 = vsyncpa [#allocation4], 1
    %s815 = scalar_lea.sflag [#allocation4], 1
    %816 = vsyncpa %s815, 1

</llo_original>
